<compile_context>
chip_gen: v6e
topology: v6e:2x2x1
jax: 0.10.0
libtpu: 0.0.40
codegen_flags: <defaults>
</compile_context>

<pallas_src>
import functools

import jax
import jax.numpy as jnp
from jax.experimental import pallas as pl
from jax.experimental.pallas import tpu as pltpu


# --------------------------- Pallas kernels -------------------------------- #
def _xw_kernel(x_ref, w_ref, xw_ref):
    # Feature transform xW = x @ W; bf16 MXU operands, f32 accumulate,
    # bf16 result (RHS of the big aggregation matmul).
    xw_ref[...] = jnp.dot(
        x_ref[...].astype(jnp.bfloat16),
        w_ref[...].astype(jnp.bfloat16),
        preferred_element_type=jnp.float32,
    ).astype(xw_ref.dtype)


def _aggregate_kernel(adj_ref, xw_ref, invdeg_ref, b_ref, out_ref,
                      *, tk, xw_resident):
    # Tiled  out += A_tile(bf16) @ xW_tile(bf16)  accumulating directly into
    # the resident f32 output block; finalize = inv_deg * out + b, ReLU.
    k = pl.program_id(1)

    @pl.when(k == 0)
    def _():
        out_ref[...] = jnp.zeros_like(out_ref)

    if xw_resident:
        start = pl.multiple_of(k * tk, 128)
        xw_tile = xw_ref[pl.ds(start, tk), :]
    else:
        xw_tile = xw_ref[...]

    out_ref[...] += jnp.dot(
        adj_ref[...], xw_tile, preferred_element_type=jnp.float32
    )

    @pl.when(k == pl.num_programs(1) - 1)
    def _():
        out_ref[...] = jnp.maximum(
            out_ref[...] * invdeg_ref[...] + b_ref[...], 0.0
        )


# --------------------------- tiling helpers -------------------------------- #
def _round_up(n, m):
    return ((n + m - 1) // m) * m


def _vmem_capacity_bytes():
    try:
        info = pltpu.get_tpu_info()
        cap = getattr(info, "vmem_capacity_bytes", None)
        if cap:
            return int(cap)
    except Exception:
        pass
    return 64 * 1024 * 1024  # conservative (v7x per-TC VMEM)


def _pick_tile(n_pad, target):
    """Largest multiple-of-128 divisor of n_pad that is <= target.

    n_pad must be a multiple of 128, so the result always satisfies the
    (8, 128) BlockSpec divisibility rule.
    """
    target = max(128, min(target, n_pad))
    units = n_pad // 128
    t_units = max(1, target // 128)
    while units % t_units:
        t_units -= 1
    return t_units * 128


def _choose_agg_tiles(n_pad, h, tm_target, tk_target):
    """Pick (tm, tk, xw_resident, vmem_limit) against the VMEM budget."""
    cap = _vmem_capacity_bytes()
    budget = int(cap * 0.45)  # headroom for compiler scratch / pipelining

    tm = _pick_tile(n_pad, tm_target)
    if n_pad >= 256:  # keep >= 2 row tiles so both v7x TCs get work
        tm = min(tm, _pick_tile(n_pad, n_pad // 2))
    tk = _pick_tile(n_pad, tk_target)

    xw_resident = (n_pad * h * 2) <= (8 << 20)

    def usage(tm_, tk_):
        a_bytes = 2 * tm_ * tk_ * 2                       # A, double-buffered
        xw_bytes = (2 * n_pad * h * 2) if xw_resident else (2 * tk_ * h * 2)
        out_bytes = 2 * tm_ * h * 4                       # resident f32 out
        misc = 2 * (tm_ * 4 + h * 4) + (1 << 20)
        return a_bytes + xw_bytes + out_bytes + misc

    while usage(tm, tk) > budget and tk > 128:
        tk = _pick_tile(n_pad, tk // 2)
    while usage(tm, tk) > budget and tm > 128:
        tm = _pick_tile(n_pad, tm // 2)

    need = usage(tm, tk)
    vmem_limit = int(min(max(need + (8 << 20), 32 << 20), cap * 0.9))
    return tm, tk, xw_resident, vmem_limit


# ------------------------------ wrappers ------------------------------------ #
def feature_transform_pallas(x_pad, w, *, tm=512):
    """x_pad: [N_pad, F] f32, w: [F, H] f32  ->  xW: [N_pad, H] bf16."""
    n_pad, f = x_pad.shape
    h = w.shape[1]
    tm = _pick_tile(n_pad, tm)

    return pl.pallas_call(
        _xw_kernel,
        out_shape=jax.ShapeDtypeStruct((n_pad, h), jnp.bfloat16),
        grid_spec=pltpu.PrefetchScalarGridSpec(
            num_scalar_prefetch=0,
            grid=(n_pad // tm,),
            in_specs=[
                pl.BlockSpec((tm, f), lambda i: (i, 0)),
                pl.BlockSpec((f, h), lambda i: (0, 0)),
            ],
            out_specs=pl.BlockSpec((tm, h), lambda i: (i, 0)),
        ),
        compiler_params=pltpu.CompilerParams(
            dimension_semantics=("parallel",)
        ),
        cost_estimate=pl.CostEstimate(
            flops=2 * n_pad * f * h,
            transcendentals=0,
            bytes_accessed=4 * (n_pad * f + f * h) + 2 * n_pad * h,
        ),
    )(x_pad, w)


def aggregate_pallas(adj_bf16, xw_bf16, inv_deg, b, *, tm=1024, tk=2048):
    """adj: [N_pad, N_pad] bf16 (0/1 + self loops), xw: [N_pad, H] bf16,
    inv_deg: [N_pad, 1] f32, b: [H] f32  ->  relu(inv_deg*(A @ xW) + b) f32."""
    n_pad = adj_bf16.shape[0]
    h = xw_bf16.shape[1]
    tm, tk, xw_resident, vmem_limit = _choose_agg_tiles(n_pad, h, tm, tk)
    b2 = b.reshape(1, h)

    if xw_resident:
        xw_spec = pl.BlockSpec((n_pad, h), lambda i, k: (0, 0))
        xw_bytes = n_pad * h * 2
    else:
        xw_spec = pl.BlockSpec((tk, h), lambda i, k: (k, 0))
        xw_bytes = (n_pad // tm) * n_pad * h * 2  # re-streamed per row tile

    kernel = functools.partial(
        _aggregate_kernel, tk=tk, xw_resident=xw_resident
    )

    return pl.pallas_call(
        kernel,
        out_shape=jax.ShapeDtypeStruct((n_pad, h), jnp.float32),
        grid_spec=pltpu.PrefetchScalarGridSpec(
            num_scalar_prefetch=0,
            # row tiles (parallel) first, K reduction axis LAST (arbitrary)
            grid=(n_pad // tm, n_pad // tk),
            in_specs=[
                pl.BlockSpec((tm, tk), lambda i, k: (i, k)),  # adjacency tile
                xw_spec,                                      # xW (resident/tiled)
                pl.BlockSpec((tm, 1), lambda i, k: (i, 0)),   # inverse degree
                pl.BlockSpec((1, h), lambda i, k: (0, 0)),    # bias
            ],
            out_specs=pl.BlockSpec((tm, h), lambda i, k: (i, 0)),
        ),
        compiler_params=pltpu.CompilerParams(
            dimension_semantics=("parallel", "arbitrary"),
            vmem_limit_bytes=vmem_limit,
        ),
        cost_estimate=pl.CostEstimate(
            flops=2 * n_pad * n_pad * h,
            transcendentals=0,
            bytes_accessed=(2 * n_pad * n_pad + xw_bytes
                            + 4 * n_pad * h + 4 * n_pad + 4 * h),
        ),
    )(adj_bf16, xw_bf16, inv_deg, b2)


# ------------------------------- JAX glue ----------------------------------- #
def build_adjacency_and_invdeg(edge_index, num_nodes, n_pad):
    """0/1 adjacency with self loops, built directly in bf16 at padded size,
    plus per-row inverse degree (f32). Scatter-max dedupes multi-edges and
    avoids double-counting explicit self edges. Padded rows/cols stay zero."""
    src = edge_index[0]
    dst = edge_index[1]
    adj = jnp.zeros((n_pad, n_pad), jnp.bfloat16)
    adj = adj.at[dst, src].max(jnp.bfloat16(1.0))              # src -> dst
    idx = jnp.arange(n_pad)
    self_loop = (idx < num_nodes).astype(jnp.bfloat16)
    adj = adj.at[idx, idx].max(self_loop)                      # self loops
    deg = jnp.sum(adj.astype(jnp.float32), axis=1, keepdims=True)  # exact 0/1
    inv_deg = 1.0 / jnp.maximum(deg, 1.0)
    return adj, inv_deg


def gnn_forward_pallas(x, edge_index, w, b, *, tm=1024, tk=2048):
    num_nodes = x.shape[0]
    n_pad = _round_up(num_nodes, 128)
    x_pad = jnp.pad(x, ((0, n_pad - num_nodes), (0, 0)))
    adj_bf16, inv_deg = build_adjacency_and_invdeg(edge_index, num_nodes, n_pad)
    xw = feature_transform_pallas(x_pad, w)
    out = aggregate_pallas(adj_bf16, xw, inv_deg, b, tm=tm, tk=tk)
    return out[:num_nodes]


class BaseGNNPallas:
    """Concrete Pallas-backed analogue of the (abstract) PyTorch BaseGNN."""

    def __init__(self, in_features: int, hidden_features: int, key):
        kw, kb = jax.random.split(key)
        scale = 1.0 / jnp.sqrt(jnp.float32(in_features))
        self.w = jax.random.normal(
            kw, (in_features, hidden_features), jnp.float32) * scale
        self.b = jax.random.normal(kb, (hidden_features,), jnp.float32) * 0.01

    def forward(self, x, edge_index, *, tm=1024, tk=2048):
        return gnn_forward_pallas(x, edge_index, self.w, self.b, tm=tm, tk=tk)

    def get_num_parameters(self) -> int:
        # Mirrors BaseGNN.get_num_parameters.
        total = 0
        for p in (self.w, self.b):
            cnt = 1
            for d in p.shape:
                cnt *= d
            total += cnt
        return total


# --------------------------------- main -------------------------------------- #
if __name__ == "__main__":
    key = jax.random.PRNGKey(0)
    k_x, k_e, k_p = jax.random.split(key, 3)

    # Small lane-dense shapes: F and H multiples of 128, N multiple of 128 so
    # the tiled row/K grid and the pl.when init/finalize paths are exercised.
    num_nodes, in_feat, hidden = 256, 128, 128
    num_edges = 1024

    x = jax.random.normal(k_x, (num_nodes, in_feat), jnp.float32)
    edge_index = jax.random.randint(
        k_e, (2, num_edges), 0, num_nodes, dtype=jnp.int32)

    model = BaseGNNPallas(in_feat, hidden, k_p)

    out = model.forward(x, edge_index)
    out = jax.block_until_ready(out)

    # Pure-JAX reference (full f32, highest precision). Tolerance accounts for
    # the intentional bf16 cast of the adjacency / x / W / xW MXU operands.
    n_pad = _round_up(num_nodes, 128)
    adj_bf16, inv_deg = build_adjacency_and_invdeg(edge_index, num_nodes, n_pad)
    adj_f32 = adj_bf16.astype(jnp.float32)[:num_nodes, :num_nodes]
    inv_deg = inv_deg[:num_nodes]
    xw_f32 = jnp.dot(x, model.w, precision=jax.lax.Precision.HIGHEST)
    ref = jnp.maximum(
        inv_deg * jnp.dot(adj_f32, xw_f32,
                          precision=jax.lax.Precision.HIGHEST) + model.b,
        0.0,
    )

    assert out.shape == (num_nodes, hidden)
    assert jnp.allclose(out, ref, atol=5e-2, rtol=5e-2)
    assert model.get_num_parameters() == in_feat * hidden + hidden

    print("KERNEL_OK")
</pallas_src>

<mosaic_0001>
module attributes {stable_mosaic.version = 11 : i64} {
  func.func @_xw_kernel(%arg0: i32, %arg1: memref<256x128xf32, #tpu.memory_space<vmem>>, %arg2: memref<128x128xf32, #tpu.memory_space<vmem>>, %arg3: memref<256x128xbf16, #tpu.memory_space<vmem>>) attributes {dimension_semantics = [#tpu.dimension_semantics<parallel>], iteration_bounds = array<i64: 1>, scalar_prefetch = 0 : i64, scratch_operands = 0 : i64, tpu.core_type = #tpu.core_type<tc>, window_params = [{transform_indices = @transform_0, window_bounds = array<i64: 256, 128>}, {pipeline_mode = #tpu.pipeline_mode<synchronous>, transform_indices = @transform_1, window_bounds = array<i64: 128, 128>}, {transform_indices = @transform_2, window_bounds = array<i64: 256, 128>}]} {
    %c0 = arith.constant 0 : index
    %c0_0 = arith.constant 0 : index
    %0 = vector.load %arg1[%c0, %c0_0] : memref<256x128xf32, #tpu.memory_space<vmem>>, vector<256x128xf32>
    %1 = arith.truncf %0 : vector<256x128xf32> to vector<256x128xbf16>
    %c0_1 = arith.constant 0 : index
    %c0_2 = arith.constant 0 : index
    %2 = vector.load %arg2[%c0_1, %c0_2] : memref<128x128xf32, #tpu.memory_space<vmem>>, vector<128x128xf32>
    %3 = arith.truncf %2 : vector<128x128xf32> to vector<128x128xbf16>
    %cst = arith.constant dense<0.000000e+00> : vector<256x128xf32>
    %4 = tpu.matmul %1, %3, %cst {dimension_numbers = #tpu.dot_dimension_numbers<[1], [0], [0], [1], [0, 0, 1, 1], [], []>} : vector<256x128xbf16>, vector<128x128xbf16>, vector<256x128xf32> -> vector<256x128xf32>
    %5 = arith.truncf %4 : vector<256x128xf32> to vector<256x128xbf16>
    %c0_3 = arith.constant 0 : index
    %c0_4 = arith.constant 0 : index
    %6 = vector.load %arg3[%c0_3, %c0_4] : memref<256x128xbf16, #tpu.memory_space<vmem>>, vector<256x128xbf16>
    tpu.vector_store %arg3[%c0_3, %c0_4], %5 {strides = array<i32>} : memref<256x128xbf16, #tpu.memory_space<vmem>>, vector<256x128xbf16>,
    return
  }
  func.func @transform_0(%arg0: i32) -> (i32, i32) {
    %c0_i32 = arith.constant 0 : i32
    %c0_i32_0 = arith.constant 0 : i32
    return %arg0, %c0_i32 : i32, i32
  }
  func.func @transform_1(%arg0: i32) -> (i32, i32) {
    %c0_i32 = arith.constant 0 : i32
    %c0_i32_0 = arith.constant 0 : i32
    %c0_i32_1 = arith.constant 0 : i32
    return %c0_i32, %c0_i32_0 : i32, i32
  }
  func.func @transform_2(%arg0: i32) -> (i32, i32) {
    %c0_i32 = arith.constant 0 : i32
    %c0_i32_0 = arith.constant 0 : i32
    return %arg0, %c0_i32 : i32, i32
  }
}

</mosaic_0001>

<llo_original>
// kernel: tpu_custom_call.1
$region0: #{tpu_custom_call.1}
  #allocation0 [shape = 'u32[]', space=smem, size = 0x4, offset = 0x4, fixed_abs, tag = 'smem constant byte address 0x4 - core index']
  #allocation1 [shape = 'u32[144,128]{1,0:T(1,128)}', space=vmem, size = 0x12000, scoped, tag = 'internal scratch']
  %s0 = inlined_call_operand.hbm [shape: f32[256,128], index: 0, kind: input, shape index: {}]
  %s1 = inlined_call_operand.hbm [shape: f32[128,128], index: 1, kind: input, shape index: {}]
  %s2 = inlined_call_operand.hbm [shape: bf16[256,128], index: 2, kind: output, shape index: {}]
  %s3 = sld [smem:[#allocation0]]
  $region26: #{tpu_custom_call.1} parent=0
    _
  %s5 = ssub.s32 1, %s3
  %s6 = scalar_select 0, %s5, %s3
  $region1: #{tpu_custom_call.1} parent=0
    #allocation2 [shape = 'u8[131072]{0}', space=vmem, size = 0x20000, scoped, tag = 'input window, operand 0, single buffered']
    #allocation3 [shape = 's32[1]{0}', space=sflag, size = 0x4, scoped, tag = 'scoped memory for tpu_custom_call.1']
    #allocation4 [shape = 's32[1]{0}', space=sflag, size = 0x4, scoped, tag = 'scoped memory for tpu_custom_call.1']
    #allocation5 [shape = 'u8[65536]{0}', space=vmem, size = 0x10000, scoped, tag = 'input window, operand 1, single buffered']
    #allocation6 [shape = 's32[1]{0}', space=sflag, size = 0x4, scoped, tag = 'scoped memory for tpu_custom_call.1']
    #allocation7 [shape = 'u8[65536]{0}', space=vmem, size = 0x10000, scoped, tag = 'output window, operand 0, single buffered']
    %7 = vsyncpa [#allocation3], 0
    %8 = vsyncpa [#allocation6], 0
    %9 = vsyncpa [#allocation4], 0
    // Predicated region
    $region2: #{tpu_custom_call.1} parent=1 // pred_check
      _
    $region3: #{tpu_custom_call.1} parent=1 // pred_check_branch
      %11 = sbr.rel (0) target = $region5
    $region4: #{tpu_custom_call.1} parent=1 // pred_region
      %s13 = ssub.s32 4096, 4096
      %14 = vsyncadd [#allocation3], %s13
      %s15 = sshll.u32 [#allocation2], 4
      %s16 = int_to_ptr.vmem [resolvable:$true] %s15
      %21 = dma.hbm_to_vmem [thread:$0]  %s0, 4096, %s16, [#allocation3], 128, 128, 8
    $region5: #{tpu_custom_call.1} parent=1 // pred_fallthru
      _
    // Predicated region
    $region6: #{tpu_custom_call.1} parent=1 // pred_check
      _
    $region7: #{tpu_custom_call.1} parent=1 // pred_check_branch
      %23 = sbr.rel (0) target = $region9
    $region8: #{tpu_custom_call.1} parent=1 // pred_region
      %s25 = ssub.s32 2048, 2048
      %26 = vsyncadd [#allocation6], %s25
      %s27 = sshll.u32 [#allocation5], 4
      %s28 = int_to_ptr.vmem [resolvable:$true] %s27
      %33 = dma.hbm_to_vmem [thread:$0]  %s1, 2048, %s28, [#allocation6], 128, 128, 8
    $region9: #{tpu_custom_call.1} parent=1 // pred_fallthru
      _
    // Predicated region
    $region10: #{tpu_custom_call.1} parent=1 // pred_check
      _
    $region11: #{tpu_custom_call.1} parent=1 // pred_check_branch
      %35 = sbr.rel (0) target = $region13
    $region12: #{tpu_custom_call.1} parent=1 // pred_region
      %36 = dma.done [#allocation3], 4096
    $region13: #{tpu_custom_call.1} parent=1 // pred_fallthru
      _
    // Predicated region
    $region14: #{tpu_custom_call.1} parent=1 // pred_check
      _
    $region15: #{tpu_custom_call.1} parent=1 // pred_check_branch
      %38 = sbr.rel (0) target = $region17
    $region16: #{tpu_custom_call.1} parent=1 // pred_region
      %39 = dma.done [#allocation6], 2048
    $region17: #{tpu_custom_call.1} parent=1 // pred_fallthru
      _
    %v41 = vld [vmem:[#allocation2] sm:$0xff]
    %v42 = vld [vmem:[#allocation2 + $0x8] sm:$0xff]
    %v43 = vld [vmem:[#allocation2 + $0x10] sm:$0xff]
    %v44 = vld [vmem:[#allocation2 + $0x18] sm:$0xff]
    %v45 = vld [vmem:[#allocation2 + $0x20] sm:$0xff]
    %v46 = vld [vmem:[#allocation2 + $0x28] sm:$0xff]
    %v47 = vld [vmem:[#allocation2 + $0x30] sm:$0xff]
    %v48 = vld [vmem:[#allocation2 + $0x38] sm:$0xff]
    %v49 = vld [vmem:[#allocation2 + $0x40] sm:$0xff]
    %v50 = vld [vmem:[#allocation2 + $0x48] sm:$0xff]
    %v51 = vld [vmem:[#allocation2 + $0x50] sm:$0xff]
    %v52 = vld [vmem:[#allocation2 + $0x58] sm:$0xff]
    %v53 = vld [vmem:[#allocation2 + $0x60] sm:$0xff]
    %v54 = vld [vmem:[#allocation2 + $0x68] sm:$0xff]
    %v55 = vld [vmem:[#allocation2 + $0x70] sm:$0xff]
    %v56 = vld [vmem:[#allocation2 + $0x78] sm:$0xff]
    %v57 = vld [vmem:[#allocation2 + $0x80] sm:$0xff]
    %v58 = vld [vmem:[#allocation2 + $0x88] sm:$0xff]
    %v59 = vld [vmem:[#allocation2 + $0x90] sm:$0xff]
    %v60 = vld [vmem:[#allocation2 + $0x98] sm:$0xff]
    %v61 = vld [vmem:[#allocation2 + $0xa0] sm:$0xff]
    %v62 = vld [vmem:[#allocation2 + $0xa8] sm:$0xff]
    %v63 = vld [vmem:[#allocation2 + $0xb0] sm:$0xff]
    %v64 = vld [vmem:[#allocation2 + $0xb8] sm:$0xff]
    %v65 = vld [vmem:[#allocation2 + $0xc0] sm:$0xff]
    %v66 = vld [vmem:[#allocation2 + $0xc8] sm:$0xff]
    %v67 = vld [vmem:[#allocation2 + $0xd0] sm:$0xff]
    %v68 = vld [vmem:[#allocation2 + $0xd8] sm:$0xff]
    %v69 = vld [vmem:[#allocation2 + $0xe0] sm:$0xff]
    %v70 = vld [vmem:[#allocation2 + $0xe8] sm:$0xff]
    %v71 = vld [vmem:[#allocation2 + $0xf0] sm:$0xff]
    %v72 = vld [vmem:[#allocation2 + $0xf8] sm:$0xff]
    %v73 = vpack.c.bf16 %v42, %v41
    %v74 = vpack.c.bf16 %v44, %v43
    %v75 = vpack.c.bf16 %v46, %v45
    %v76 = vpack.c.bf16 %v48, %v47
    %v77 = vpack.c.bf16 %v50, %v49
    %v78 = vpack.c.bf16 %v52, %v51
    %v79 = vpack.c.bf16 %v54, %v53
    %v80 = vpack.c.bf16 %v56, %v55
    %v81 = vpack.c.bf16 %v58, %v57
    %v82 = vpack.c.bf16 %v60, %v59
    %v83 = vpack.c.bf16 %v62, %v61
    %v84 = vpack.c.bf16 %v64, %v63
    %v85 = vpack.c.bf16 %v66, %v65
    %v86 = vpack.c.bf16 %v68, %v67
    %v87 = vpack.c.bf16 %v70, %v69
    %v88 = vpack.c.bf16 %v72, %v71
    %v89 = vld [vmem:[#allocation5] sm:$0xff]
    %v90 = vld [vmem:[#allocation5 + $0x8] sm:$0xff]
    %v91 = vld [vmem:[#allocation5 + $0x10] sm:$0xff]
    %v92 = vld [vmem:[#allocation5 + $0x18] sm:$0xff]
    %v93 = vld [vmem:[#allocation5 + $0x20] sm:$0xff]
    %v94 = vld [vmem:[#allocation5 + $0x28] sm:$0xff]
    %v95 = vld [vmem:[#allocation5 + $0x30] sm:$0xff]
    %v96 = vld [vmem:[#allocation5 + $0x38] sm:$0xff]
    %v97 = vld [vmem:[#allocation5 + $0x40] sm:$0xff]
    %v98 = vld [vmem:[#allocation5 + $0x48] sm:$0xff]
    %v99 = vld [vmem:[#allocation5 + $0x50] sm:$0xff]
    %v100 = vld [vmem:[#allocation5 + $0x58] sm:$0xff]
    %v101 = vld [vmem:[#allocation5 + $0x60] sm:$0xff]
    %v102 = vld [vmem:[#allocation5 + $0x68] sm:$0xff]
    %v103 = vld [vmem:[#allocation5 + $0x70] sm:$0xff]
    %v104 = vld [vmem:[#allocation5 + $0x78] sm:$0xff]
    %v105 = vpack.c.bf16 %v90, %v89
    %v106 = vpack.c.bf16 %v92, %v91
    %v107 = vpack.c.bf16 %v94, %v93
    %v108 = vpack.c.bf16 %v96, %v95
    %v109 = vpack.c.bf16 %v98, %v97
    %v110 = vpack.c.bf16 %v100, %v99
    %v111 = vpack.c.bf16 %v102, %v101
    %v112 = vpack.c.bf16 %v104, %v103
    %113 = vmatprep.subr.bf16.mxu0 0
    %114 = vmatpush1.bf16.msra.mxu0 %v112
    %115 = vmatprep.subr.bf16.mxu0 0
    %116 = vmatpush1.bf16.msra.mxu0 %v111
    %117 = vmatprep.subr.bf16.mxu0 0
    %118 = vmatpush1.bf16.msra.mxu0 %v110
    %119 = vmatprep.subr.bf16.mxu0 0
    %120 = vmatpush1.bf16.msra.mxu0 %v109
    %121 = vmatprep.subr.bf16.mxu0 0
    %122 = vmatpush1.bf16.msra.mxu0 %v108
    %123 = vmatprep.subr.bf16.mxu0 0
    %124 = vmatpush1.bf16.msra.mxu0 %v107
    %125 = vmatprep.subr.bf16.mxu0 0
    %126 = vmatpush1.bf16.msra.mxu0 %v106
    %127 = vmatprep.subr.bf16.mxu0 0
    %128 = vmatpush1.bf16.msra.mxu0 %v105
    %129 = vmatprep.subr.bf16.mxu0 0
    %130 = vmatpush2.bf16.msra.mxu0 0
    %131 = vmatprep.subr.bf16.mxu0 0
    %132 = vmatpush2.bf16.msra.mxu0 0
    %133 = vmatprep.subr.bf16.mxu0 0
    %134 = vmatpush2.bf16.msra.mxu0 0
    %135 = vmatprep.subr.bf16.mxu0 0
    %136 = vmatpush2.bf16.msra.mxu0 0
    %137 = vmatprep.subr.bf16.mxu0 0
    %138 = vmatpush2.bf16.msra.mxu0 0
    %139 = vmatprep.subr.bf16.mxu0 0
    %140 = vmatpush2.bf16.msra.mxu0 0
    %141 = vmatprep.subr.bf16.mxu0 0
    %142 = vmatpush2.bf16.msra.mxu0 0
    %143 = vmatprep.subr.bf16.mxu0 0
    %144 = vmatpush2.bf16.msra.mxu0 0
    %145 = vmatprep.mubr.bf16.mxu0 0
    %146 = vmatmul.mubr.bf16.gmra.mxu0 %v73
    %v147 = vpop.f32.mrf.mxu0
    %v148 = vadd.f32 0.0, %v147
    %v149 = vpop.f32.mrf.mxu0
    %v150 = vpop.f32.mrf.mxu0
    %v151 = vadd.f32 0.0, %v150
    %v152 = vpop.f32.mrf.mxu0
    %153 = vmatprep.mubr.bf16.mxu0 0
    %154 = vmatmul.mubr.bf16.gmra.mxu0 %v74
    %v155 = vpop.f32.mrf.mxu0
    %v156 = vadd.f32 0.0, %v155
    %v157 = vpop.f32.mrf.mxu0
    %v158 = vpop.f32.mrf.mxu0
    %v159 = vadd.f32 0.0, %v158
    %v160 = vpop.f32.mrf.mxu0
    %161 = vmatprep.mubr.bf16.mxu0 0
    %162 = vmatmul.mubr.bf16.gmra.mxu0 %v75
    %v163 = vpop.f32.mrf.mxu0
    %v164 = vadd.f32 0.0, %v163
    %v165 = vpop.f32.mrf.mxu0
    %v166 = vpop.f32.mrf.mxu0
    %v167 = vadd.f32 0.0, %v166
    %v168 = vpop.f32.mrf.mxu0
    %169 = vmatprep.mubr.bf16.mxu0 0
    %170 = vmatmul.mubr.bf16.gmra.mxu0 %v76
    %v171 = vpop.f32.mrf.mxu0
    %v172 = vadd.f32 0.0, %v171
    %v173 = vpop.f32.mrf.mxu0
    %v174 = vpop.f32.mrf.mxu0
    %v175 = vadd.f32 0.0, %v174
    %v176 = vpop.f32.mrf.mxu0
    %177 = vmatprep.mubr.bf16.mxu0 0
    %178 = vmatmul.mubr.bf16.gmra.mxu0 %v77
    %v179 = vpop.f32.mrf.mxu0
    %v180 = vadd.f32 0.0, %v179
    %v181 = vpop.f32.mrf.mxu0
    %v182 = vpop.f32.mrf.mxu0
    %v183 = vadd.f32 0.0, %v182
    %v184 = vpop.f32.mrf.mxu0
    %185 = vmatprep.mubr.bf16.mxu0 0
    %186 = vmatmul.mubr.bf16.gmra.mxu0 %v78
    %v187 = vpop.f32.mrf.mxu0
    %v188 = vadd.f32 0.0, %v187
    %v189 = vpop.f32.mrf.mxu0
    %v190 = vpop.f32.mrf.mxu0
    %v191 = vadd.f32 0.0, %v190
    %v192 = vpop.f32.mrf.mxu0
    %193 = vmatprep.mubr.bf16.mxu0 0
    %194 = vmatmul.mubr.bf16.gmra.mxu0 %v79
    %v195 = vpop.f32.mrf.mxu0
    %v196 = vadd.f32 0.0, %v195
    %v197 = vpop.f32.mrf.mxu0
    %v198 = vpop.f32.mrf.mxu0
    %v199 = vadd.f32 0.0, %v198
    %v200 = vpop.f32.mrf.mxu0
    %201 = vmatprep.mubr.bf16.mxu0 0
    %202 = vmatmul.mubr.bf16.gmra.mxu0 %v80
    %v203 = vpop.f32.mrf.mxu0
    %v204 = vadd.f32 0.0, %v203
    %v205 = vpop.f32.mrf.mxu0
    %v206 = vpop.f32.mrf.mxu0
    %v207 = vadd.f32 0.0, %v206
    %v208 = vpop.f32.mrf.mxu0
    %209 = vmatprep.mubr.bf16.mxu0 0
    %210 = vmatmul.mubr.bf16.gmra.mxu0 %v81
    %v211 = vpop.f32.mrf.mxu0
    %v212 = vadd.f32 0.0, %v211
    %v213 = vpop.f32.mrf.mxu0
    %v214 = vpop.f32.mrf.mxu0
    %v215 = vadd.f32 0.0, %v214
    %v216 = vpop.f32.mrf.mxu0
    %217 = vmatprep.mubr.bf16.mxu0 0
    %218 = vmatmul.mubr.bf16.gmra.mxu0 %v82
    %v219 = vpop.f32.mrf.mxu0
    %v220 = vadd.f32 0.0, %v219
    %v221 = vpop.f32.mrf.mxu0
    %v222 = vpop.f32.mrf.mxu0
    %v223 = vadd.f32 0.0, %v222
    %v224 = vpop.f32.mrf.mxu0
    %225 = vmatprep.mubr.bf16.mxu0 0
    %226 = vmatmul.mubr.bf16.gmra.mxu0 %v83
    %v227 = vpop.f32.mrf.mxu0
    %v228 = vadd.f32 0.0, %v227
    %v229 = vpop.f32.mrf.mxu0
    %v230 = vpop.f32.mrf.mxu0
    %v231 = vadd.f32 0.0, %v230
    %v232 = vpop.f32.mrf.mxu0
    %233 = vmatprep.mubr.bf16.mxu0 0
    %234 = vmatmul.mubr.bf16.gmra.mxu0 %v84
    %v235 = vpop.f32.mrf.mxu0
    %v236 = vadd.f32 0.0, %v235
    %v237 = vpop.f32.mrf.mxu0
    %v238 = vpop.f32.mrf.mxu0
    %v239 = vadd.f32 0.0, %v238
    %v240 = vpop.f32.mrf.mxu0
    %241 = vmatprep.mubr.bf16.mxu0 0
    %242 = vmatmul.mubr.bf16.gmra.mxu0 %v85
    %v243 = vpop.f32.mrf.mxu0
    %v244 = vadd.f32 0.0, %v243
    %v245 = vpop.f32.mrf.mxu0
    %v246 = vpop.f32.mrf.mxu0
    %v247 = vadd.f32 0.0, %v246
    %v248 = vpop.f32.mrf.mxu0
    %249 = vmatprep.mubr.bf16.mxu0 0
    %250 = vmatmul.mubr.bf16.gmra.mxu0 %v86
    %v251 = vpop.f32.mrf.mxu0
    %v252 = vadd.f32 0.0, %v251
    %v253 = vpop.f32.mrf.mxu0
    %v254 = vpop.f32.mrf.mxu0
    %v255 = vadd.f32 0.0, %v254
    %v256 = vpop.f32.mrf.mxu0
    %257 = vmatprep.mubr.bf16.mxu0 0
    %258 = vmatmul.mubr.bf16.gmra.mxu0 %v87
    %v259 = vpop.f32.mrf.mxu0
    %v260 = vadd.f32 0.0, %v259
    %v261 = vpop.f32.mrf.mxu0
    %v262 = vpop.f32.mrf.mxu0
    %v263 = vadd.f32 0.0, %v262
    %v264 = vpop.f32.mrf.mxu0
    %265 = vmatprep.mubr.bf16.mxu0 0
    %266 = vmatmul.mubr.bf16.gmra.mxu0 %v88
    %v267 = vpop.f32.mrf.mxu0
    %v268 = vadd.f32 0.0, %v267
    %v269 = vpop.f32.mrf.mxu0
    %v270 = vpop.f32.mrf.mxu0
    %v271 = vadd.f32 0.0, %v270
    %v272 = vpop.f32.mrf.mxu0
    %273 = vdwg.mxu0
    %v274 = vpack.c.bf16 %v151, %v148
    %v275 = vpack.c.bf16 %v159, %v156
    %v276 = vpack.c.bf16 %v167, %v164
    %v277 = vpack.c.bf16 %v175, %v172
    %v278 = vpack.c.bf16 %v183, %v180
    %v279 = vpack.c.bf16 %v191, %v188
    %v280 = vpack.c.bf16 %v199, %v196
    %v281 = vpack.c.bf16 %v207, %v204
    %v282 = vpack.c.bf16 %v215, %v212
    %v283 = vpack.c.bf16 %v223, %v220
    %v284 = vpack.c.bf16 %v231, %v228
    %v285 = vpack.c.bf16 %v239, %v236
    %v286 = vpack.c.bf16 %v247, %v244
    %v287 = vpack.c.bf16 %v255, %v252
    %v288 = vpack.c.bf16 %v263, %v260
    %v289 = vpack.c.bf16 %v271, %v268
    %v306 = vunpack.c.l.b16 %v274
    %v307 = vunpack.c.h.b16 %v274
    %v308 = vunpack.c.l.b16 %v275
    %v309 = vunpack.c.h.b16 %v275
    %v310 = vunpack.c.l.b16 %v276
    %v311 = vunpack.c.h.b16 %v276
    %v312 = vunpack.c.l.b16 %v277
    %v313 = vunpack.c.h.b16 %v277
    %v314 = vunpack.c.l.b16 %v278
    %v315 = vunpack.c.h.b16 %v278
    %v316 = vunpack.c.l.b16 %v279
    %v317 = vunpack.c.h.b16 %v279
    %v318 = vunpack.c.l.b16 %v280
    %v319 = vunpack.c.h.b16 %v280
    %v320 = vunpack.c.l.b16 %v281
    %v321 = vunpack.c.h.b16 %v281
    %v322 = vunpack.c.l.b16 %v282
    %v323 = vunpack.c.h.b16 %v282
    %v324 = vunpack.c.l.b16 %v283
    %v325 = vunpack.c.h.b16 %v283
    %v326 = vunpack.c.l.b16 %v284
    %v327 = vunpack.c.h.b16 %v284
    %v328 = vunpack.c.l.b16 %v285
    %v329 = vunpack.c.h.b16 %v285
    %v330 = vunpack.c.l.b16 %v286
    %v331 = vunpack.c.h.b16 %v286
    %v332 = vunpack.c.l.b16 %v287
    %v333 = vunpack.c.h.b16 %v287
    %v334 = vunpack.c.l.b16 %v288
    %v335 = vunpack.c.h.b16 %v288
    %v336 = vunpack.c.l.b16 %v289
    %v337 = vunpack.c.h.b16 %v289
    %v338 = vpack.c.b16 %v306, %v306
    %v339 = vpack.c.b16 %v307, %v307
    %v340 = vpack.c.b16 %v308, %v308
    %v341 = vpack.c.b16 %v309, %v309
    %v342 = vpack.c.b16 %v310, %v310
    %v343 = vpack.c.b16 %v311, %v311
    %v344 = vpack.c.b16 %v312, %v312
    %v345 = vpack.c.b16 %v313, %v313
    %v346 = vpack.c.b16 %v314, %v314
    %v347 = vpack.c.b16 %v315, %v315
    %v348 = vpack.c.b16 %v316, %v316
    %v349 = vpack.c.b16 %v317, %v317
    %v350 = vpack.c.b16 %v318, %v318
    %v351 = vpack.c.b16 %v319, %v319
    %v352 = vpack.c.b16 %v320, %v320
    %v353 = vpack.c.b16 %v321, %v321
    %v354 = vpack.c.b16 %v322, %v322
    %v355 = vpack.c.b16 %v323, %v323
    %v356 = vpack.c.b16 %v324, %v324
    %v357 = vpack.c.b16 %v325, %v325
    %v358 = vpack.c.b16 %v326, %v326
    %v359 = vpack.c.b16 %v327, %v327
    %v360 = vpack.c.b16 %v328, %v328
    %v361 = vpack.c.b16 %v329, %v329
    %v362 = vpack.c.b16 %v330, %v330
    %v363 = vpack.c.b16 %v331, %v331
    %v364 = vpack.c.b16 %v332, %v332
    %v365 = vpack.c.b16 %v333, %v333
    %v366 = vpack.c.b16 %v334, %v334
    %v367 = vpack.c.b16 %v335, %v335
    %v368 = vpack.c.b16 %v336, %v336
    %v369 = vpack.c.b16 %v337, %v337
    %402 = vst [vmem:[#allocation7] sm:$0xf] %v338
    %403 = vst [vmem:[#allocation7 + $0x4] sm:$0xf] %v339
    %404 = vst [vmem:[#allocation7 + $0x8] sm:$0xf] %v340
    %405 = vst [vmem:[#allocation7 + $0xc] sm:$0xf] %v341
    %406 = vst [vmem:[#allocation7 + $0x10] sm:$0xf] %v342
    %407 = vst [vmem:[#allocation7 + $0x14] sm:$0xf] %v343
    %408 = vst [vmem:[#allocation7 + $0x18] sm:$0xf] %v344
    %409 = vst [vmem:[#allocation7 + $0x1c] sm:$0xf] %v345
    %410 = vst [vmem:[#allocation7 + $0x20] sm:$0xf] %v346
    %411 = vst [vmem:[#allocation7 + $0x24] sm:$0xf] %v347
    %412 = vst [vmem:[#allocation7 + $0x28] sm:$0xf] %v348
    %413 = vst [vmem:[#allocation7 + $0x2c] sm:$0xf] %v349
    %414 = vst [vmem:[#allocation7 + $0x30] sm:$0xf] %v350
    %415 = vst [vmem:[#allocation7 + $0x34] sm:$0xf] %v351
    %416 = vst [vmem:[#allocation7 + $0x38] sm:$0xf] %v352
    %417 = vst [vmem:[#allocation7 + $0x3c] sm:$0xf] %v353
    %418 = vst [vmem:[#allocation7 + $0x40] sm:$0xf] %v354
    %419 = vst [vmem:[#allocation7 + $0x44] sm:$0xf] %v355
    %420 = vst [vmem:[#allocation7 + $0x48] sm:$0xf] %v356
    %421 = vst [vmem:[#allocation7 + $0x4c] sm:$0xf] %v357
    %422 = vst [vmem:[#allocation7 + $0x50] sm:$0xf] %v358
    %423 = vst [vmem:[#allocation7 + $0x54] sm:$0xf] %v359
    %424 = vst [vmem:[#allocation7 + $0x58] sm:$0xf] %v360
    %425 = vst [vmem:[#allocation7 + $0x5c] sm:$0xf] %v361
    %426 = vst [vmem:[#allocation7 + $0x60] sm:$0xf] %v362
    %427 = vst [vmem:[#allocation7 + $0x64] sm:$0xf] %v363
    %428 = vst [vmem:[#allocation7 + $0x68] sm:$0xf] %v364
    %429 = vst [vmem:[#allocation7 + $0x6c] sm:$0xf] %v365
    %430 = vst [vmem:[#allocation7 + $0x70] sm:$0xf] %v366
    %431 = vst [vmem:[#allocation7 + $0x74] sm:$0xf] %v367
    %432 = vst [vmem:[#allocation7 + $0x78] sm:$0xf] %v368
    %433 = vst [vmem:[#allocation7 + $0x7c] sm:$0xf] %v369
    // Predicated region
    $region18: #{tpu_custom_call.1} parent=1 // pred_check
      _
    $region19: #{tpu_custom_call.1} parent=1 // pred_check_branch
      %435 = sbr.rel (0) target = $region21
    $region20: #{tpu_custom_call.1} parent=1 // pred_region
      %s437 = ssub.s32 2048, 2048
      %438 = vsyncadd [#allocation4], %s437
      %s439 = sshll.u32 [#allocation7], 4
      %s440 = int_to_ptr.vmem [resolvable:$true] %s439
      %445 = dma.vmem_to_hbm [thread:$0]  %s440, 2048, %s2, [#allocation4], 64, 64, 4
    $region21: #{tpu_custom_call.1} parent=1 // pred_fallthru
      _
    // Predicated region
    $region22: #{tpu_custom_call.1} parent=1 // pred_check
      _
    $region23: #{tpu_custom_call.1} parent=1 // pred_check_branch
      %447 = sbr.rel (0) target = $region25
    $region24: #{tpu_custom_call.1} parent=1 // pred_region
      %448 = dma.done [#allocation4], 2048
    $region25: #{tpu_custom_call.1} parent=1 // pred_fallthru
      _
    %449 = vsyncpa [#allocation3], 1
    %450 = vsyncpa [#allocation6], 1
    %451 = vsyncpa [#allocation4], 1

</llo_original>
